<compile_context>
chip_gen: v7x
topology: tpu7x:2x2x1
jax: 0.10.0
libtpu: 0.0.40
codegen_flags: <defaults>
</compile_context>

<pallas_src>
import math
from functools import partial

import jax
import jax.numpy as jnp
from jax.experimental import pallas as pl
from jax.experimental.pallas import tpu as pltpu


# ---------------------------------------------------------------------------
# helpers
# ---------------------------------------------------------------------------

_GELU_C = math.sqrt(2.0 / math.pi)


def _gelu(x):
    # tanh-approximate GELU (tanh lowers to the EUP).
    # TODO(synk): PyTorch nn.GELU() defaults to the exact erf formulation; the tanh
    # approximation differs by <~1e-3 and is used here for Mosaic-safe transcendentals.
    return 0.5 * x * (1.0 + jnp.tanh(_GELU_C * (x + 0.044715 * x * x * x)))


def _pick_block(dim, pref, align):
    """Largest legal block: `pref` (a multiple of `align`) when the dim is big, else full dim."""
    del align  # `pref` is already a multiple of `align`; full dim is always legal.
    return dim if dim <= pref else pref


# ---------------------------------------------------------------------------
# Conv1d (+ bias, optional fused GELU) kernel
# ---------------------------------------------------------------------------

def _conv_tap_kernel(x_ref, w_ref, b_ref, o_ref, *, n_taps, c_in, apply_gelu):
    # x_ref: (K, 1, C_in, T_BLK)   w_ref: (K, CO_BLK, C_in)
    # b_ref: (CO_BLK, 1)           o_ref: (1, CO_BLK, T_BLK)
    co_blk, t_blk = o_ref.shape[1], o_ref.shape[2]
    acc = jnp.zeros((co_blk, t_blk), jnp.float32)
    for j in range(n_taps):                      # static unroll (K <= 10)
        w_j = w_ref[j].astype(jnp.float32)       # (CO_BLK, C_in)
        x_j = x_ref[j, 0].astype(jnp.float32)    # (C_in, T_BLK)
        if c_in == 1:
            acc = acc + w_j * x_j                # outer product via broadcast (first layer)
        else:
            acc = acc + jnp.dot(w_j, x_j, preferred_element_type=jnp.float32)
    acc = acc + b_ref[...].astype(jnp.float32)   # (CO_BLK, 1) broadcast over time
    if apply_gelu:
        acc = _gelu(acc)
    o_ref[0, :, :] = acc.astype(o_ref.dtype)


def conv1d_block(x, weight, bias, *, stride, apply_gelu):
    """Strided Conv1d (+ bias, optionally fused GELU).

    x:      (B, C_in, T_in)
    weight: (C_out, C_in, K)  -- PyTorch Conv1d layout
    bias:   (C_out,)          -- zeros when conv_bias=False
    """
    B, c_in, t_in = x.shape
    c_out, _, k = weight.shape
    t_out = (t_in - k) // stride + 1
    assert t_out > 0, "input too short for this conv layer"

    # Tap stack: x_taps[j, b, ci, t] = x[b, ci, t*stride + j]  (XLA strided slices;
    # layout plumbing only -> every Pallas block is contiguous and halo-free).
    taps = [
        jax.lax.slice(x, (0, 0, j), (B, c_in, j + (t_out - 1) * stride + 1), (1, 1, stride))
        for j in range(k)
    ]
    x_taps = jnp.stack(taps, axis=0)                 # (K, B, C_in, T_out)
    w_t = jnp.transpose(weight, (2, 0, 1))           # (K, C_out, C_in)  lane-dense weight tiles
    b2d = bias.reshape(c_out, 1)

    t_blk = _pick_block(t_out, 512, 128)             # lane-dense time blocks
    co_blk = _pick_block(c_out, 128, 8)
    grid = (B, pl.cdiv(c_out, co_blk), pl.cdiv(t_out, t_blk))

    kernel = partial(_conv_tap_kernel, n_taps=k, c_in=c_in, apply_gelu=apply_gelu)

    return pl.pallas_call(
        kernel,
        out_shape=jax.ShapeDtypeStruct((B, c_out, t_out), x.dtype),
        grid_spec=pltpu.PrefetchScalarGridSpec(
            num_scalar_prefetch=0,
            grid=grid,
            in_specs=[
                pl.BlockSpec((k, 1, c_in, t_blk), lambda b, co, t: (0, b, 0, t)),
                pl.BlockSpec((k, co_blk, c_in), lambda b, co, t: (0, co, 0)),
                pl.BlockSpec((co_blk, 1), lambda b, co, t: (co, 0)),
            ],
            out_specs=pl.BlockSpec((1, co_blk, t_blk), lambda b, co, t: (b, co, t)),
        ),
        compiler_params=pltpu.CompilerParams(
            dimension_semantics=("parallel", "parallel", "parallel")),
    )(x_taps, w_t, b2d)


# ---------------------------------------------------------------------------
# Fp32GroupNorm(C, C) + GELU kernel   (per-channel stats over time)
# ---------------------------------------------------------------------------

def _group_norm_gelu_kernel(y_ref, g_ref, b_ref, o_ref, *, eps):
    y = y_ref[0].astype(jnp.float32)                           # (C_BLK, T)
    mean = jnp.mean(y, axis=-1, keepdims=True)
    var = jnp.mean(jnp.square(y - mean), axis=-1, keepdims=True)
    yhat = (y - mean) * jax.lax.rsqrt(var + eps)
    out = yhat * g_ref[...].astype(jnp.float32) + b_ref[...].astype(jnp.float32)
    o_ref[0, :, :] = _gelu(out).astype(o_ref.dtype)


def group_norm_gelu(y, gamma, beta, *, eps=1e-5):
    """Fp32GroupNorm(num_groups=C, num_channels=C, affine) followed by GELU, (B, C, T)."""
    B, C, T = y.shape
    c_blk = _pick_block(C, 128, 8)
    grid = (B, pl.cdiv(C, c_blk))
    g2d, b2d = gamma.reshape(C, 1), beta.reshape(C, 1)
    return pl.pallas_call(
        partial(_group_norm_gelu_kernel, eps=eps),
        out_shape=jax.ShapeDtypeStruct((B, C, T), y.dtype),
        grid_spec=pltpu.PrefetchScalarGridSpec(
            num_scalar_prefetch=0,
            grid=grid,
            in_specs=[
                pl.BlockSpec((1, c_blk, T), lambda b, c: (b, c, 0)),   # stats need full T
                pl.BlockSpec((c_blk, 1), lambda b, c: (c, 0)),
                pl.BlockSpec((c_blk, 1), lambda b, c: (c, 0)),
            ],
            out_specs=pl.BlockSpec((1, c_blk, T), lambda b, c: (b, c, 0)),
        ),
        compiler_params=pltpu.CompilerParams(
            dimension_semantics=("parallel", "parallel")),
    )(y, g2d, b2d)


# ---------------------------------------------------------------------------
# TransposeLast -> Fp32LayerNorm(C) -> TransposeLast, + GELU kernel
# (per-time-step stats over channels; time axis tiled, stays lane-dense)
# ---------------------------------------------------------------------------

def _layer_norm_gelu_kernel(y_ref, g_ref, b_ref, o_ref, *, eps):
    y = y_ref[0].astype(jnp.float32)                           # (C, T_BLK)
    mean = jnp.mean(y, axis=0, keepdims=True)                  # stats over channels
    var = jnp.mean(jnp.square(y - mean), axis=0, keepdims=True)
    yhat = (y - mean) * jax.lax.rsqrt(var + eps)
    out = yhat * g_ref[...].astype(jnp.float32) + b_ref[...].astype(jnp.float32)
    o_ref[0, :, :] = _gelu(out).astype(o_ref.dtype)


def layer_norm_gelu(y, gamma, beta, *, eps=1e-5):
    B, C, T = y.shape
    t_blk = _pick_block(T, 512, 128)
    grid = (B, pl.cdiv(T, t_blk))
    g2d, b2d = gamma.reshape(C, 1), beta.reshape(C, 1)
    return pl.pallas_call(
        partial(_layer_norm_gelu_kernel, eps=eps),
        out_shape=jax.ShapeDtypeStruct((B, C, T), y.dtype),
        grid_spec=pltpu.PrefetchScalarGridSpec(
            num_scalar_prefetch=0,
            grid=grid,
            in_specs=[
                pl.BlockSpec((1, C, t_blk), lambda b, t: (b, 0, t)),   # stats need full C
                pl.BlockSpec((C, 1), lambda b, t: (0, 0)),
                pl.BlockSpec((C, 1), lambda b, t: (0, 0)),
            ],
            out_specs=pl.BlockSpec((1, C, t_blk), lambda b, t: (b, 0, t)),
        ),
        compiler_params=pltpu.CompilerParams(
            dimension_semantics=("parallel", "parallel")),
    )(y, g2d, b2d)


# ---------------------------------------------------------------------------
# Module: params init + forward
# ---------------------------------------------------------------------------

def init_conv_feature_extractor(key, conv_layers, *, mode="default", conv_bias=False,
                                dtype=jnp.float32):
    assert mode in ("default", "layer_norm")
    params = []
    in_d = 1
    for i, (dim, k, stride) in enumerate(conv_layers):
        key, wk = jax.random.split(key)
        std = math.sqrt(2.0 / (in_d * k))                      # kaiming_normal_ (fan_in, gain=sqrt(2))
        w = (std * jax.random.normal(wk, (dim, in_d, k), dtype=jnp.float32)).astype(dtype)
        b = jnp.zeros((dim,), dtype)                           # conv_bias=False -> zero bias
        has_gn = (mode == "default" and i == 0)
        has_ln = (mode == "layer_norm")
        gamma = jnp.ones((dim,), jnp.float32) if (has_gn or has_ln) else None
        beta = jnp.zeros((dim,), jnp.float32) if (has_gn or has_ln) else None
        params.append(dict(weight=w, bias=b, gamma=gamma, beta=beta,
                           k=k, stride=stride, has_gn=has_gn, has_ln=has_ln))
        in_d = dim
    return params


def conv_feature_extraction_forward(x, params):
    """x: (B, T_raw) waveform -> (B, C_last, T_out)."""
    h = x[:, None, :]                                          # unsqueeze(1): (B, 1, T)
    for layer in params:
        fuse_gelu = not (layer["has_gn"] or layer["has_ln"])
        h = conv1d_block(h, layer["weight"], layer["bias"],
                         stride=layer["stride"], apply_gelu=fuse_gelu)
        # nn.Dropout(p): identity here (inference forward / p=0.0 default).
        if layer["has_gn"]:
            h = group_norm_gelu(h, layer["gamma"], layer["beta"])
        elif layer["has_ln"]:
            h = layer_norm_gelu(h, layer["gamma"], layer["beta"])
    return h


# ---------------------------------------------------------------------------
# Pure-JAX reference (same math, same GELU approximation)
# ---------------------------------------------------------------------------

def _ref_forward(x, params):
    h = x[:, None, :].astype(jnp.float32)
    for layer in params:
        w = layer["weight"].astype(jnp.float32)
        b = layer["bias"].astype(jnp.float32)
        k, s = layer["k"], layer["stride"]
        B, c_in, t_in = h.shape
        t_out = (t_in - k) // s + 1
        acc = jnp.zeros((B, w.shape[0], t_out), jnp.float32)
        for j in range(k):
            xs = jax.lax.slice(h, (0, 0, j), (B, c_in, j + (t_out - 1) * s + 1), (1, 1, s))
            acc = acc + jnp.einsum("oc,bct->bot", w[:, :, j], xs,
                                   precision=jax.lax.Precision.HIGHEST)
        acc = acc + b[None, :, None]
        if layer["has_gn"]:
            mean = acc.mean(axis=-1, keepdims=True)
            var = jnp.square(acc - mean).mean(axis=-1, keepdims=True)
            acc = (acc - mean) * jax.lax.rsqrt(var + 1e-5)
            acc = acc * layer["gamma"][None, :, None] + layer["beta"][None, :, None]
        elif layer["has_ln"]:
            mean = acc.mean(axis=1, keepdims=True)
            var = jnp.square(acc - mean).mean(axis=1, keepdims=True)
            acc = (acc - mean) * jax.lax.rsqrt(var + 1e-5)
            acc = acc * layer["gamma"][None, :, None] + layer["beta"][None, :, None]
        h = _gelu(acc)
    return h


# ---------------------------------------------------------------------------
# demo
# ---------------------------------------------------------------------------

if __name__ == "__main__":
    root = jax.random.PRNGKey(0)
    root, xk, pk, xk2, pk2 = jax.random.split(root, 5)

    # --- 'default' mode: GroupNorm on first layer, fused GELU in the rest ---
    conv_layers = [(8, 10, 5), (16, 3, 2), (16, 2, 2)]
    B, T = 2, 480
    x = jax.random.normal(xk, (B, T), dtype=jnp.float32)
    params = init_conv_feature_extractor(pk, conv_layers, mode="default")

    y = conv_feature_extraction_forward(x, params)
    jax.block_until_ready(y)

    t_exp = T
    for (_, kk, ss) in conv_layers:
        t_exp = (t_exp - kk) // ss + 1
    assert y.shape == (B, conv_layers[-1][0], t_exp), y.shape
    y_ref = _ref_forward(x, params)
    assert jnp.allclose(y, y_ref, atol=2e-3, rtol=2e-3), float(jnp.max(jnp.abs(y - y_ref)))

    # --- 'layer_norm' mode: channel LayerNorm + GELU in every block ---
    conv_layers_ln = [(8, 4, 2), (16, 3, 2)]
    B2, T2 = 2, 64
    x2 = jax.random.normal(xk2, (B2, T2), dtype=jnp.float32)
    params2 = init_conv_feature_extractor(pk2, conv_layers_ln, mode="layer_norm")

    y2 = conv_feature_extraction_forward(x2, params2)
    jax.block_until_ready(y2)
    y2_ref = _ref_forward(x2, params2)
    assert jnp.allclose(y2, y2_ref, atol=2e-3, rtol=2e-3), float(jnp.max(jnp.abs(y2 - y2_ref)))

    print("KERNEL_OK")
</pallas_src>

<mosaic_0001>
module attributes {stable_mosaic.version = 11 : i64} {
  func.func @_conv_tap_kernel(%arg0: i32, %arg1: i32, %arg2: i32, %arg3: memref<10x1x1x95xf32, #tpu.memory_space<vmem>>, %arg4: memref<10x8x1xf32, #tpu.memory_space<vmem>>, %arg5: memref<8x1xf32, #tpu.memory_space<vmem>>, %arg6: memref<1x8x95xf32, #tpu.memory_space<vmem>>) attributes {dimension_semantics = [#tpu.dimension_semantics<parallel>, #tpu.dimension_semantics<parallel>, #tpu.dimension_semantics<parallel>], iteration_bounds = array<i64: 2, 1, 1>, scalar_prefetch = 0 : i64, scratch_operands = 0 : i64, tpu.core_type = #tpu.core_type<tc>, window_params = [{transform_indices = @transform_0, window_bounds = array<i64: 10, 1, 1, 95>}, {transform_indices = @transform_1, window_bounds = array<i64: 10, 8, 1>}, {transform_indices = @transform_2, window_bounds = array<i64: 8, 1>}, {transform_indices = @transform_3, window_bounds = array<i64: 1, 8, 95>}]} {
    %cst = arith.constant 0.000000e+00 : f32
    %0 = vector.broadcast %cst : f32 to vector<8x95xf32>
    %c0 = arith.constant 0 : index
    %c0_0 = arith.constant 0 : index
    %c0_1 = arith.constant 0 : index
    %1 = vector.load %arg4[%c0, %c0_0, %c0_1] : memref<10x8x1xf32, #tpu.memory_space<vmem>>, vector<1x8x1xf32>
    %2 = vector.shape_cast %1 : vector<1x8x1xf32> to vector<8x1xf32>
    %c0_2 = arith.constant 0 : index
    %c0_3 = arith.constant 0 : index
    %c0_4 = arith.constant 0 : index
    %c0_5 = arith.constant 0 : index
    %3 = vector.load %arg3[%c0_2, %c0_3, %c0_4, %c0_5] : memref<10x1x1x95xf32, #tpu.memory_space<vmem>>, vector<1x1x1x95xf32>
    %4 = vector.shape_cast %3 : vector<1x1x1x95xf32> to vector<1x95xf32>
    %5 = vector.broadcast %2 : vector<8x1xf32> to vector<8x95xf32>
    %6 = vector.broadcast %4 : vector<1x95xf32> to vector<8x95xf32>
    %7 = arith.mulf %5, %6 : vector<8x95xf32>
    %8 = arith.addf %0, %7 : vector<8x95xf32>
    %c1 = arith.constant 1 : index
    %c0_6 = arith.constant 0 : index
    %c0_7 = arith.constant 0 : index
    %9 = vector.load %arg4[%c1, %c0_6, %c0_7] : memref<10x8x1xf32, #tpu.memory_space<vmem>>, vector<1x8x1xf32>
    %10 = vector.shape_cast %9 : vector<1x8x1xf32> to vector<8x1xf32>
    %c1_8 = arith.constant 1 : index
    %c0_9 = arith.constant 0 : index
    %c0_10 = arith.constant 0 : index
    %c0_11 = arith.constant 0 : index
    %11 = vector.load %arg3[%c1_8, %c0_9, %c0_10, %c0_11] : memref<10x1x1x95xf32, #tpu.memory_space<vmem>>, vector<1x1x1x95xf32>
    %12 = vector.shape_cast %11 : vector<1x1x1x95xf32> to vector<1x95xf32>
    %13 = vector.broadcast %10 : vector<8x1xf32> to vector<8x95xf32>
    %14 = vector.broadcast %12 : vector<1x95xf32> to vector<8x95xf32>
    %15 = arith.mulf %13, %14 : vector<8x95xf32>
    %16 = arith.addf %8, %15 : vector<8x95xf32>
    %c2 = arith.constant 2 : index
    %c0_12 = arith.constant 0 : index
    %c0_13 = arith.constant 0 : index
    %17 = vector.load %arg4[%c2, %c0_12, %c0_13] : memref<10x8x1xf32, #tpu.memory_space<vmem>>, vector<1x8x1xf32>
    %18 = vector.shape_cast %17 : vector<1x8x1xf32> to vector<8x1xf32>
    %c2_14 = arith.constant 2 : index
    %c0_15 = arith.constant 0 : index
    %c0_16 = arith.constant 0 : index
    %c0_17 = arith.constant 0 : index
    %19 = vector.load %arg3[%c2_14, %c0_15, %c0_16, %c0_17] : memref<10x1x1x95xf32, #tpu.memory_space<vmem>>, vector<1x1x1x95xf32>
    %20 = vector.shape_cast %19 : vector<1x1x1x95xf32> to vector<1x95xf32>
    %21 = vector.broadcast %18 : vector<8x1xf32> to vector<8x95xf32>
    %22 = vector.broadcast %20 : vector<1x95xf32> to vector<8x95xf32>
    %23 = arith.mulf %21, %22 : vector<8x95xf32>
    %24 = arith.addf %16, %23 : vector<8x95xf32>
    %c3 = arith.constant 3 : index
    %c0_18 = arith.constant 0 : index
    %c0_19 = arith.constant 0 : index
    %25 = vector.load %arg4[%c3, %c0_18, %c0_19] : memref<10x8x1xf32, #tpu.memory_space<vmem>>, vector<1x8x1xf32>
    %26 = vector.shape_cast %25 : vector<1x8x1xf32> to vector<8x1xf32>
    %c3_20 = arith.constant 3 : index
    %c0_21 = arith.constant 0 : index
    %c0_22 = arith.constant 0 : index
    %c0_23 = arith.constant 0 : index
    %27 = vector.load %arg3[%c3_20, %c0_21, %c0_22, %c0_23] : memref<10x1x1x95xf32, #tpu.memory_space<vmem>>, vector<1x1x1x95xf32>
    %28 = vector.shape_cast %27 : vector<1x1x1x95xf32> to vector<1x95xf32>
    %29 = vector.broadcast %26 : vector<8x1xf32> to vector<8x95xf32>
    %30 = vector.broadcast %28 : vector<1x95xf32> to vector<8x95xf32>
    %31 = arith.mulf %29, %30 : vector<8x95xf32>
    %32 = arith.addf %24, %31 : vector<8x95xf32>
    %c4 = arith.constant 4 : index
    %c0_24 = arith.constant 0 : index
    %c0_25 = arith.constant 0 : index
    %33 = vector.load %arg4[%c4, %c0_24, %c0_25] : memref<10x8x1xf32, #tpu.memory_space<vmem>>, vector<1x8x1xf32>
    %34 = vector.shape_cast %33 : vector<1x8x1xf32> to vector<8x1xf32>
    %c4_26 = arith.constant 4 : index
    %c0_27 = arith.constant 0 : index
    %c0_28 = arith.constant 0 : index
    %c0_29 = arith.constant 0 : index
    %35 = vector.load %arg3[%c4_26, %c0_27, %c0_28, %c0_29] : memref<10x1x1x95xf32, #tpu.memory_space<vmem>>, vector<1x1x1x95xf32>
    %36 = vector.shape_cast %35 : vector<1x1x1x95xf32> to vector<1x95xf32>
    %37 = vector.broadcast %34 : vector<8x1xf32> to vector<8x95xf32>
    %38 = vector.broadcast %36 : vector<1x95xf32> to vector<8x95xf32>
    %39 = arith.mulf %37, %38 : vector<8x95xf32>
    %40 = arith.addf %32, %39 : vector<8x95xf32>
    %c5 = arith.constant 5 : index
    %c0_30 = arith.constant 0 : index
    %c0_31 = arith.constant 0 : index
    %41 = vector.load %arg4[%c5, %c0_30, %c0_31] : memref<10x8x1xf32, #tpu.memory_space<vmem>>, vector<1x8x1xf32>
    %42 = vector.shape_cast %41 : vector<1x8x1xf32> to vector<8x1xf32>
    %c5_32 = arith.constant 5 : index
    %c0_33 = arith.constant 0 : index
    %c0_34 = arith.constant 0 : index
    %c0_35 = arith.constant 0 : index
    %43 = vector.load %arg3[%c5_32, %c0_33, %c0_34, %c0_35] : memref<10x1x1x95xf32, #tpu.memory_space<vmem>>, vector<1x1x1x95xf32>
    %44 = vector.shape_cast %43 : vector<1x1x1x95xf32> to vector<1x95xf32>
    %45 = vector.broadcast %42 : vector<8x1xf32> to vector<8x95xf32>
    %46 = vector.broadcast %44 : vector<1x95xf32> to vector<8x95xf32>
    %47 = arith.mulf %45, %46 : vector<8x95xf32>
    %48 = arith.addf %40, %47 : vector<8x95xf32>
    %c6 = arith.constant 6 : index
    %c0_36 = arith.constant 0 : index
    %c0_37 = arith.constant 0 : index
    %49 = vector.load %arg4[%c6, %c0_36, %c0_37] : memref<10x8x1xf32, #tpu.memory_space<vmem>>, vector<1x8x1xf32>
    %50 = vector.shape_cast %49 : vector<1x8x1xf32> to vector<8x1xf32>
    %c6_38 = arith.constant 6 : index
    %c0_39 = arith.constant 0 : index
    %c0_40 = arith.constant 0 : index
    %c0_41 = arith.constant 0 : index
    %51 = vector.load %arg3[%c6_38, %c0_39, %c0_40, %c0_41] : memref<10x1x1x95xf32, #tpu.memory_space<vmem>>, vector<1x1x1x95xf32>
    %52 = vector.shape_cast %51 : vector<1x1x1x95xf32> to vector<1x95xf32>
    %53 = vector.broadcast %50 : vector<8x1xf32> to vector<8x95xf32>
    %54 = vector.broadcast %52 : vector<1x95xf32> to vector<8x95xf32>
    %55 = arith.mulf %53, %54 : vector<8x95xf32>
    %56 = arith.addf %48, %55 : vector<8x95xf32>
    %c7 = arith.constant 7 : index
    %c0_42 = arith.constant 0 : index
    %c0_43 = arith.constant 0 : index
    %57 = vector.load %arg4[%c7, %c0_42, %c0_43] : memref<10x8x1xf32, #tpu.memory_space<vmem>>, vector<1x8x1xf32>
    %58 = vector.shape_cast %57 : vector<1x8x1xf32> to vector<8x1xf32>
    %c7_44 = arith.constant 7 : index
    %c0_45 = arith.constant 0 : index
    %c0_46 = arith.constant 0 : index
    %c0_47 = arith.constant 0 : index
    %59 = vector.load %arg3[%c7_44, %c0_45, %c0_46, %c0_47] : memref<10x1x1x95xf32, #tpu.memory_space<vmem>>, vector<1x1x1x95xf32>
    %60 = vector.shape_cast %59 : vector<1x1x1x95xf32> to vector<1x95xf32>
    %61 = vector.broadcast %58 : vector<8x1xf32> to vector<8x95xf32>
    %62 = vector.broadcast %60 : vector<1x95xf32> to vector<8x95xf32>
    %63 = arith.mulf %61, %62 : vector<8x95xf32>
    %64 = arith.addf %56, %63 : vector<8x95xf32>
    %c8 = arith.constant 8 : index
    %c0_48 = arith.constant 0 : index
    %c0_49 = arith.constant 0 : index
    %65 = vector.load %arg4[%c8, %c0_48, %c0_49] : memref<10x8x1xf32, #tpu.memory_space<vmem>>, vector<1x8x1xf32>
    %66 = vector.shape_cast %65 : vector<1x8x1xf32> to vector<8x1xf32>
    %c8_50 = arith.constant 8 : index
    %c0_51 = arith.constant 0 : index
    %c0_52 = arith.constant 0 : index
    %c0_53 = arith.constant 0 : index
    %67 = vector.load %arg3[%c8_50, %c0_51, %c0_52, %c0_53] : memref<10x1x1x95xf32, #tpu.memory_space<vmem>>, vector<1x1x1x95xf32>
    %68 = vector.shape_cast %67 : vector<1x1x1x95xf32> to vector<1x95xf32>
    %69 = vector.broadcast %66 : vector<8x1xf32> to vector<8x95xf32>
    %70 = vector.broadcast %68 : vector<1x95xf32> to vector<8x95xf32>
    %71 = arith.mulf %69, %70 : vector<8x95xf32>
    %72 = arith.addf %64, %71 : vector<8x95xf32>
    %c9 = arith.constant 9 : index
    %c0_54 = arith.constant 0 : index
    %c0_55 = arith.constant 0 : index
    %73 = vector.load %arg4[%c9, %c0_54, %c0_55] : memref<10x8x1xf32, #tpu.memory_space<vmem>>, vector<1x8x1xf32>
    %74 = vector.shape_cast %73 : vector<1x8x1xf32> to vector<8x1xf32>
    %c9_56 = arith.constant 9 : index
    %c0_57 = arith.constant 0 : index
    %c0_58 = arith.constant 0 : index
    %c0_59 = arith.constant 0 : index
    %75 = vector.load %arg3[%c9_56, %c0_57, %c0_58, %c0_59] : memref<10x1x1x95xf32, #tpu.memory_space<vmem>>, vector<1x1x1x95xf32>
    %76 = vector.shape_cast %75 : vector<1x1x1x95xf32> to vector<1x95xf32>
    %77 = vector.broadcast %74 : vector<8x1xf32> to vector<8x95xf32>
    %78 = vector.broadcast %76 : vector<1x95xf32> to vector<8x95xf32>
    %79 = arith.mulf %77, %78 : vector<8x95xf32>
    %80 = arith.addf %72, %79 : vector<8x95xf32>
    %c0_60 = arith.constant 0 : index
    %c0_61 = arith.constant 0 : index
    %81 = vector.load %arg5[%c0_60, %c0_61] : memref<8x1xf32, #tpu.memory_space<vmem>>, vector<8x1xf32>
    %82 = vector.broadcast %81 : vector<8x1xf32> to vector<8x95xf32>
    %83 = arith.addf %80, %82 : vector<8x95xf32>
    %c0_62 = arith.constant 0 : index
    %c0_63 = arith.constant 0 : index
    %c0_64 = arith.constant 0 : index
    %84 = vector.load %arg6[%c0_62, %c0_63, %c0_64] : memref<1x8x95xf32, #tpu.memory_space<vmem>>, vector<1x8x95xf32>
    %85 = vector.shape_cast %84 : vector<1x8x95xf32> to vector<8x95xf32>
    %86 = vector.shape_cast %83 : vector<8x95xf32> to vector<1x8x95xf32>
    tpu.vector_store %arg6[%c0_62, %c0_63, %c0_64], %86 {strides = array<i32>} : memref<1x8x95xf32, #tpu.memory_space<vmem>>, vector<1x8x95xf32>,
    return
  }
  func.func @transform_0(%arg0: i32, %arg1: i32, %arg2: i32) -> (i32, i32, i32, i32) {
    %c0_i32 = arith.constant 0 : i32
    %c0_i32_0 = arith.constant 0 : i32
    %c0_i32_1 = arith.constant 0 : i32
    return %c0_i32, %arg0, %c0_i32_0, %arg2 : i32, i32, i32, i32
  }
  func.func @transform_1(%arg0: i32, %arg1: i32, %arg2: i32) -> (i32, i32, i32) {
    %c0_i32 = arith.constant 0 : i32
    %c0_i32_0 = arith.constant 0 : i32
    %c0_i32_1 = arith.constant 0 : i32
    return %c0_i32, %arg1, %c0_i32_0 : i32, i32, i32
  }
  func.func @transform_2(%arg0: i32, %arg1: i32, %arg2: i32) -> (i32, i32) {
    %c0_i32 = arith.constant 0 : i32
    %c0_i32_0 = arith.constant 0 : i32
    return %arg1, %c0_i32 : i32, i32
  }
  func.func @transform_3(%arg0: i32, %arg1: i32, %arg2: i32) -> (i32, i32, i32) {
    %c0_i32 = arith.constant 0 : i32
    return %arg0, %arg1, %arg2 : i32, i32, i32
  }
}

</mosaic_0001>

<llo_original>
// kernel: tpu_custom_call.1
$region0: #{tpu_custom_call.1}
  #allocation0 [shape = 'u32[]', space=smem, size = 0x4, offset = 0x4, fixed_abs, tag = 'smem constant byte address 0x4 - core index']
  #allocation1 [shape = 'u32[144,128]{1,0:T(1,128)}', space=vmem, size = 0x12000, scoped, tag = 'internal scratch']
  %s0 = inlined_call_operand.vmem [shape: f32[10,2,1,95], index: 0, kind: input, shape index: {}]
  %s1 = inlined_call_operand.vmem [shape: f32[10,8,1], index: 1, kind: input, shape index: {}]
  %s2 = inlined_call_operand.vmem [shape: f32[8,1], index: 2, kind: input, shape index: {}]
  %s3 = inlined_call_operand.hbm [shape: f32[2,8,95], index: 3, kind: output, shape index: {}]
  %s4 = sld [smem:[#allocation0]]
  $region86: #{tpu_custom_call.1} parent=0
    _
  %s6 = ssub.s32 1, %s4
  %s7 = scalar_select 0, %s6, %s4
  $region1: #{tpu_custom_call.1} parent=0
    #allocation2 [shape = 'u8[10240]{0}', space=vmem, size = 0x2800, scoped, tag = 'input window, operand 0']
    #allocation3 [shape = 'u8[8192]{0}', space=vmem, size = 0x2000, scoped, tag = 'output window, operand 0']
    #allocation4 [shape = 's32[2]{0}', space=sflag, size = 0x8, scoped, tag = 'scoped memory for tpu_custom_call.1']
    %8 = vsyncpa [#allocation4], 0
    %s9 = scalar_lea.sflag [#allocation4], 1
    %10 = vsyncpa %s9, 0
    loop: start=0, step=1, limit=4
    $region2: #{tpu_custom_call.1} parent=1 // loop_pre_header
      _
    $region3: #{tpu_custom_call.1} parent=1 // loop_header
      %s12 = sphi 0, %s16
      %p13 = scmp.ge.s32.totalorder %s12, 4
      %s19 = sphi 0, %s38
      %s20 = sphi 0, %s34
      %s21 = sphi 0, %s30
      %s22 = sphi 0, %s19
      %s23 = sphi 0, %s20
      %s24 = sphi 0, %s21
      %s25 = sphi 0, %s22
      %s26 = sphi 0, %s23
      %s27 = sphi 0, %s24
      %s43 = sphi 0, %s45
      %s46 = sphi 0, %s43
      %s47 = sphi 0, %s46
      %s63 = sphi 0, %s47
      %s69 = sphi 0, %s71
      %s72 = sphi 0, %s69
      %s73 = sphi 0, %s72
      %s89 = sphi 0, %s73
      %s95 = sphi 0, %s97
      %s98 = sphi 0, %s95
      %s99 = sphi 0, %s98
      %s115 = sphi 0, %s99
      %s125 = sphi 0, %s127
      %s128 = sphi 0, %s125
      %s129 = sphi 0, %s128
      %s145 = sphi 0, %s129
    $region4: #{tpu_custom_call.1} parent=1 // loop_header_branch
      %15 = sbr.rel (%p13) target = $region8
    $region5: #{tpu_custom_call.1} parent=1 // loop_body
      %s17 = ssub.s32 %s12, 1
      %s18 = ssub.s32 %s12, 2
      %s28 = sadd.s32 1, %s21
      %p29 = scmp.ge.s32.totalorder %s28, 1
      %s30 = scalar_select %p29, 0, %s28
      %s31 = sadd.s32 1, %s20
      %s32 = scalar_select %p29, %s31, %s20
      %p33 = scmp.ge.s32.totalorder %s32, 1
      %s34 = scalar_select %p33, 0, %s32
      %s35 = sadd.s32 1, %s19
      %s36 = scalar_select %p33, %s35, %s19
      %p37 = scmp.ge.s32.totalorder %s36, 2
      %s38 = scalar_select %p37, 0, %s36
      %s39 = ssub.s32 %s19, %s38
      %s40 = ssub.s32 %s21, %s30
      %s41 = sor.u32 %s39, %s40
      %p42 = scmp.eq.s32.totalorder %s41, 0
      %s44 = sadd.s32 %s43, 1
      %s45 = scalar_select %p42, %s43, %s44
      %p48 = pneg %p42
      %p49 = scmp.eq.s32.totalorder %s12, 1
      %p50 = por %p48, %p49
      %p51 = scmp.ne.s32.totalorder %s43, %s46
      %p52 = scmp.eq.s32.totalorder %s12, 0
      %p53 = por %p51, %p52
      %p54 = scmp.ne.s32.totalorder %s43, %s46
      %p55 = scmp.eq.s32.totalorder %s17, 1
      %p56 = por %p54, %p55
      %p57 = scmp.ne.s32.totalorder %s46, %s47
      %p58 = scmp.eq.s32.totalorder %s17, 0
      %p59 = por %p57, %p58
      %p60 = scmp.ne.s32.totalorder %s46, %s47
      %p61 = scmp.eq.s32.totalorder %s18, 1
      %p62 = por %p60, %p61
      %p64 = scmp.ne.s32.totalorder %s47, %s63
      %p65 = scmp.eq.s32.totalorder %s18, 0
      %p66 = por %p64, %p65
      %s67 = ssub.s32 %s20, %s34
      %p68 = scmp.eq.s32.totalorder %s67, 0
      %s70 = sadd.s32 %s69, 1
      %s71 = scalar_select %p68, %s69, %s70
      %p74 = pneg %p68
      %p75 = scmp.eq.s32.totalorder %s12, 1
      %p76 = por %p74, %p75
      %p77 = scmp.ne.s32.totalorder %s69, %s72
      %p78 = scmp.eq.s32.totalorder %s12, 0
      %p79 = por %p77, %p78
      %p80 = scmp.ne.s32.totalorder %s69, %s72
      %p81 = scmp.eq.s32.totalorder %s17, 1
      %p82 = por %p80, %p81
      %p83 = scmp.ne.s32.totalorder %s72, %s73
      %p84 = scmp.eq.s32.totalorder %s17, 0
      %p85 = por %p83, %p84
      %p86 = scmp.ne.s32.totalorder %s72, %s73
      %p87 = scmp.eq.s32.totalorder %s18, 1
      %p88 = por %p86, %p87
      %p90 = scmp.ne.s32.totalorder %s73, %s89
      %p91 = scmp.eq.s32.totalorder %s18, 0
      %p92 = por %p90, %p91
      %s93 = ssub.s32 %s20, %s34
      %p94 = scmp.eq.s32.totalorder %s93, 0
      %s96 = sadd.s32 %s95, 1
      %s97 = scalar_select %p94, %s95, %s96
      %p100 = pneg %p94
      %p101 = scmp.eq.s32.totalorder %s12, 1
      %p102 = por %p100, %p101
      %p103 = scmp.ne.s32.totalorder %s95, %s98
      %p104 = scmp.eq.s32.totalorder %s12, 0
      %p105 = por %p103, %p104
      %p106 = scmp.ne.s32.totalorder %s95, %s98
      %p107 = scmp.eq.s32.totalorder %s17, 1
      %p108 = por %p106, %p107
      %p109 = scmp.ne.s32.totalorder %s98, %s99
      %p110 = scmp.eq.s32.totalorder %s17, 0
      %p111 = por %p109, %p110
      %p112 = scmp.ne.s32.totalorder %s98, %s99
      %p113 = scmp.eq.s32.totalorder %s18, 1
      %p114 = por %p112, %p113
      %p116 = scmp.ne.s32.totalorder %s99, %s115
      %p117 = scmp.eq.s32.totalorder %s18, 0
      %p118 = por %p116, %p117
      %s119 = ssub.s32 %s19, %s38
      %s120 = ssub.s32 %s20, %s34
      %s121 = sor.u32 %s119, %s120
      %s122 = ssub.s32 %s21, %s30
      %s123 = sor.u32 %s121, %s122
      %p124 = scmp.eq.s32.totalorder %s123, 0
      %s126 = sadd.s32 %s125, 1
      %s127 = scalar_select %p124, %s125, %s126
      %p130 = pneg %p124
      %p131 = scmp.eq.s32.totalorder %s12, 1
      %p132 = por %p130, %p131
      %p133 = scmp.ne.s32.totalorder %s125, %s128
      %p134 = scmp.eq.s32.totalorder %s12, 0
      %p135 = por %p133, %p134
      %p136 = scmp.ne.s32.totalorder %s125, %s128
      %p137 = scmp.eq.s32.totalorder %s17, 1
      %p138 = por %p136, %p137
      %p139 = scmp.ne.s32.totalorder %s128, %s129
      %p140 = scmp.eq.s32.totalorder %s17, 0
      %p141 = por %p139, %p140
      %p142 = scmp.ne.s32.totalorder %s128, %s129
      %p143 = scmp.eq.s32.totalorder %s18, 1
      %p144 = por %p142, %p143
      %p146 = scmp.ne.s32.totalorder %s129, %s145
      %p147 = scmp.eq.s32.totalorder %s18, 0
      %p148 = por %p146, %p147
      %p149 = scmp.le.s32.totalorder 1, %s12
      %p150 = scmp.lt.s32.totalorder %s12, 3
      %p151 = pnand %p149, %p150
      %p152 = pneg %p151
      // Predicated region
      $region9: #{tpu_custom_call.1} parent=5 // pred_check
        _
      $region10: #{tpu_custom_call.1} parent=5 // pred_check_branch
        %154 = sbr.rel (%p151) target = $region12
      $region11: #{tpu_custom_call.1} parent=5 // pred_region
        %s155 = ssub.s32 %s12, 1
        // Predicated region
        $region13: #{tpu_custom_call.1} parent=11 // pred_check
          %p156 = pneg %p85
        $region14: #{tpu_custom_call.1} parent=11 // pred_check_branch
          %158 = sbr.rel (%p156) target = $region16
        $region15: #{tpu_custom_call.1} parent=11 // pred_region
          %p159 = scmp.lt.s32.totalorder %s23, 0
          %s160 = scalar_select %p159, %s23, 0
          %s161 = smul.addr %s160, 8
          %s162 = scalar_lea.vmem %s1, %s161
        $region16: #{tpu_custom_call.1} parent=11 // pred_fallthru
          _
        // Predicated region
        $region17: #{tpu_custom_call.1} parent=11 // pred_check
          %p163 = pneg %p111
        $region18: #{tpu_custom_call.1} parent=11 // pred_check_branch
          %165 = sbr.rel (%p163) target = $region20
        $region19: #{tpu_custom_call.1} parent=11 // pred_region
          %p166 = scmp.lt.s32.totalorder %s23, 0
          %s167 = scalar_select %p166, %s23, 0
          %s168 = smul.addr %s167, 8
          %s169 = scalar_lea.vmem %s2, %s168
        $region20: #{tpu_custom_call.1} parent=11 // pred_fallthru
          _
      $region12: #{tpu_custom_call.1} parent=5 // pred_fallthru
        _
      %p170 = scmp.lt.s32.totalorder %s12, 2
      // Predicated region
      $region21: #{tpu_custom_call.1} parent=5 // pred_check
        %p171 = pneg %p170
      $region22: #{tpu_custom_call.1} parent=5 // pred_check_branch
        %173 = sbr.rel (%p171) target = $region24
      $region23: #{tpu_custom_call.1} parent=5 // pred_region
        // Predicated region
        $region25: #{tpu_custom_call.1} parent=23 // pred_check
          %p174 = pneg %p53
        $region26: #{tpu_custom_call.1} parent=23 // pred_check_branch
          %176 = sbr.rel (%p174) target = $region28
        $region27: #{tpu_custom_call.1} parent=23 // pred_region
          %s177 = sand.u32 %s43, 1
          %s178 = sand.u32 %s43, 1
          %s179 = smul.addr %s178, 10
          %s180 = scalar_lea.vmem [#allocation2], %s179
          %s181 = sadd.s32 %s21, %s19
          %s182 = scalar_lea.vmem %s0, %s181
          // Predicated region
          $region29: #{tpu_custom_call.1} parent=27 // pred_check
            _
          $region30: #{tpu_custom_call.1} parent=27 // pred_check_branch
            %184 = sbr.rel (0) target = $region32
          $region31: #{tpu_custom_call.1} parent=27 // pred_region
            // Predicated region
            $region33: #{tpu_custom_call.1} parent=31 // pred_check
              _
            $region34: #{tpu_custom_call.1} parent=31 // pred_check_branch
              %186 = sbr.rel target = $region36
            $region35: #{tpu_custom_call.1} parent=31 // pred_region
              // Predicated region
              $region48: #{tpu_custom_call.1} parent=35 // pred_check
                _
              $region49: #{tpu_custom_call.1} parent=35 // pred_check_branch
                %219 = sbr.rel (0) target = $region51
              $region50: #{tpu_custom_call.1} parent=35 // pred_region
                loop: start=0, step=1, limit=1
                $region52: #{tpu_custom_call.1} parent=50 // loop_pre_header
                  _
                $region53: #{tpu_custom_call.1} parent=50 // loop_header
                  %s221 = sphi 0, %s225
                  %p222 = scmp.ge.s32.totalorder %s221, 1
                  %s226 = sphi %s182, %s182
                  %s227 = sphi %s180, %s180
                $region54: #{tpu_custom_call.1} parent=50 // loop_header_branch
                  %224 = sbr.rel (%p222) target = $region58
                $region55: #{tpu_custom_call.1} parent=50 // loop_body
                  _
                $region56: #{tpu_custom_call.1} parent=50 // loop_footer
                  %s225 = sadd.s32 1, %s221
                $region57: #{tpu_custom_call.1} parent=50 // loop_footer_branch
                  %220 = sbr.rel target = $region53
                $region58: #{tpu_custom_call.1} parent=50 // loop_exit
                  _
                loop: start=0, step=1, limit=1
                $region59: #{tpu_custom_call.1} parent=50 // loop_pre_header
                  _
                $region60: #{tpu_custom_call.1} parent=50 // loop_header
                  %s230 = sphi 0, %s234
                  %p231 = scmp.ge.s32.totalorder %s230, 1
                  %s235 = sphi %s182, %s182
                  %s236 = sphi %s180, %s180
                $region61: #{tpu_custom_call.1} parent=50 // loop_header_branch
                  %233 = sbr.rel (%p231) target = $region65
                $region62: #{tpu_custom_call.1} parent=50 // loop_body
                  %v237 = vld [vmem:[%s235] sm:$0x1]
                  %238 = vst [vmem:[%s236] sm:$0x1] %v237
                  %v239 = vld [vmem:[%s235 + $0x2] sm:$0x1]
                  %240 = vst [vmem:[%s236 + $0x1] sm:$0x1] %v239
                  %v241 = vld [vmem:[%s235 + $0x4] sm:$0x1]
                  %242 = vst [vmem:[%s236 + $0x2] sm:$0x1] %v241
                  %v243 = vld [vmem:[%s235 + $0x6] sm:$0x1]
                  %244 = vst [vmem:[%s236 + $0x3] sm:$0x1] %v243
                  %v245 = vld [vmem:[%s235 + $0x8] sm:$0x1]
                  %246 = vst [vmem:[%s236 + $0x4] sm:$0x1] %v245
                  %v247 = vld [vmem:[%s235 + $0xa] sm:$0x1]
                  %248 = vst [vmem:[%s236 + $0x5] sm:$0x1] %v247
                  %v249 = vld [vmem:[%s235 + $0xc] sm:$0x1]
                  %250 = vst [vmem:[%s236 + $0x6] sm:$0x1] %v249
                  %v251 = vld [vmem:[%s235 + $0xe] sm:$0x1]
                  %252 = vst [vmem:[%s236 + $0x7] sm:$0x1] %v251
                  %v253 = vld [vmem:[%s235 + $0x10] sm:$0x1]
                  %254 = vst [vmem:[%s236 + $0x8] sm:$0x1] %v253
                  %v255 = vld [vmem:[%s235 + $0x12] sm:$0x1]
                  %256 = vst [vmem:[%s236 + $0x9] sm:$0x1] %v255
                $region63: #{tpu_custom_call.1} parent=50 // loop_footer
                  %s234 = sadd.s32 1, %s230
                $region64: #{tpu_custom_call.1} parent=50 // loop_footer_branch
                  %229 = sbr.rel target = $region60
                $region65: #{tpu_custom_call.1} parent=50 // loop_exit
                  _
              $region51: #{tpu_custom_call.1} parent=35 // pred_fallthru
                _
            $region36: #{tpu_custom_call.1} parent=31 // pred_fallthru
              _
            // Predicated region
            $region37: #{tpu_custom_call.1} parent=31 // pred_check
              _
            $region38: #{tpu_custom_call.1} parent=31 // pred_check_branch
              %188 = sbr.rel (0) target = $region40
            $region39: #{tpu_custom_call.1} parent=31 // pred_region
              loop: start=0, step=1, limit=1
              $region41: #{tpu_custom_call.1} parent=39 // loop_pre_header
                _
              $region42: #{tpu_custom_call.1} parent=39 // loop_header
                %s191 = sphi 0, %s195
                %p192 = scmp.ge.s32.totalorder %s191, 1
                %s196 = sphi %s182, %s182
                %s197 = sphi %s180, %s180
              $region43: #{tpu_custom_call.1} parent=39 // loop_header_branch
                %194 = sbr.rel (%p192) target = $region47
              $region44: #{tpu_custom_call.1} parent=39 // loop_body
                %v198 = vld [vmem:[%s196] sm:$0x1]
                %199 = vst [vmem:[%s197] sm:$0x1] %v198
                %v200 = vld [vmem:[%s196 + $0x2] sm:$0x1]
                %201 = vst [vmem:[%s197 + $0x1] sm:$0x1] %v200
                %v202 = vld [vmem:[%s196 + $0x4] sm:$0x1]
                %203 = vst [vmem:[%s197 + $0x2] sm:$0x1] %v202
                %v204 = vld [vmem:[%s196 + $0x6] sm:$0x1]
                %205 = vst [vmem:[%s197 + $0x3] sm:$0x1] %v204
                %v206 = vld [vmem:[%s196 + $0x8] sm:$0x1]
                %207 = vst [vmem:[%s197 + $0x4] sm:$0x1] %v206
                %v208 = vld [vmem:[%s196 + $0xa] sm:$0x1]
                %209 = vst [vmem:[%s197 + $0x5] sm:$0x1] %v208
                %v210 = vld [vmem:[%s196 + $0xc] sm:$0x1]
                %211 = vst [vmem:[%s197 + $0x6] sm:$0x1] %v210
                %v212 = vld [vmem:[%s196 + $0xe] sm:$0x1]
                %213 = vst [vmem:[%s197 + $0x7] sm:$0x1] %v212
                %v214 = vld [vmem:[%s196 + $0x10] sm:$0x1]
                %215 = vst [vmem:[%s197 + $0x8] sm:$0x1] %v214
                %v216 = vld [vmem:[%s196 + $0x12] sm:$0x1]
                %217 = vst [vmem:[%s197 + $0x9] sm:$0x1] %v216
              $region45: #{tpu_custom_call.1} parent=39 // loop_footer
                %s195 = sadd.s32 1, %s191
              $region46: #{tpu_custom_call.1} parent=39 // loop_footer_branch
                %190 = sbr.rel target = $region42
              $region47: #{tpu_custom_call.1} parent=39 // loop_exit
                _
            $region40: #{tpu_custom_call.1} parent=31 // pred_fallthru
              _
          $region32: #{tpu_custom_call.1} parent=27 // pred_fallthru
            _
          %257 = vnop
        $region28: #{tpu_custom_call.1} parent=23 // pred_fallthru
          _
      $region24: #{tpu_custom_call.1} parent=5 // pred_fallthru
        _
      %p258 = scmp.le.s32.totalorder 1, %s12
      %p259 = scmp.lt.s32.totalorder %s12, 3
      %p260 = pnand %p258, %p259
      %p261 = pneg %p260
      // Predicated region
      $region66: #{tpu_custom_call.1} parent=5 // pred_check
        _
      $region67: #{tpu_custom_call.1} parent=5 // pred_check_branch
        %263 = sbr.rel (%p260) target = $region69
      $region68: #{tpu_custom_call.1} parent=5 // pred_region
        %s264 = ssub.s32 %s12, 1
        %s265 = sand.u32 %s46, 1
        %s266 = sand.u32 %s46, 1
        %s267 = smul.addr %s266, 10
        %s268 = scalar_lea.vmem [#allocation2], %s267
        // Predicated region
        $region70: #{tpu_custom_call.1} parent=68 // pred_check
          %p269 = pneg %p59
        $region71: #{tpu_custom_call.1} parent=68 // pred_check_branch
          %271 = sbr.rel (%p269) target = $region73
        $region72: #{tpu_custom_call.1} parent=68 // pred_region
          _
        $region73: #{tpu_custom_call.1} parent=68 // pred_fallthru
          _
        %s272 = sand.u32 %s46, 1
        %s273 = sand.u32 %s46, 1
        %s274 = smul.addr %s273, 10
        %s275 = scalar_lea.vmem [#allocation2], %s274
        %p276 = pneg %p59
        %p277 = pneg %p56
        %p278 = scmp.lt.s32.totalorder %s23, 0
        %s279 = scalar_select %p278, %s23, 0
        %s280 = smul.addr %s279, 8
        %s281 = scalar_lea.vmem %s1, %s280
        %p282 = pneg %p85
        %p283 = pneg %p82
        %p284 = scmp.lt.s32.totalorder %s23, 0
        %s285 = scalar_select %p284, %s23, 0
        %s286 = smul.addr %s285, 8
        %s287 = scalar_lea.vmem %s2, %s286
        %p288 = pneg %p111
        %p289 = pneg %p108
        %p290 = pneg %p141
        %p291 = pneg %p138
        %s292 = sand.u32 %s128, 1
        %s293 = scalar_lea.sflag [#allocation4], %s292
        %s294 = sand.u32 %s128, 1
        %s295 = smul.addr %s294, 8
        %s296 = scalar_lea.vmem [#allocation3], %s295
        %p297 = scmp.lt.s32.totalorder %s23, 0
        %s298 = scalar_select %p297, %s23, 0
        %s299 = smul.addr %s298, 8
        %s300 = scalar_lea.vmem %s1, %s299
        %p301 = scmp.lt.s32.totalorder %s23, 0
        %s302 = scalar_select %p301, %s23, 0
        %s303 = smul.addr %s302, 8
        %s304 = scalar_lea.vmem %s2, %s303
        %v305 = vld [vmem:[%s300] sm:$0xff]
        %v306 = vld [vmem:[%s268] sm:$0x1]
        %308 = vset.pattern.permute.xlu0 0
        %309 = vperm.xlu0 %308, %v305
        %v310 = vpop.permute.xlu0 %309
        %v313 = vlaneseq
        %v314 = vshrl.u32 %v313, 7
        %v315 = vsub.s32 0, %v314
        %v316 = vrot.slane %v306, %v315
        %v318 = vmul.f32 %v310, %v316
        %v319 = vadd.f32 %v318, 0.0
        %s320 = scalar_lea.vmem %s300, 8
        %v321 = vld [vmem:[%s320] sm:$0xff]
        %s322 = scalar_lea.vmem %s268, 1 [#allocation2]
        %v323 = vld [vmem:[%s322] sm:$0x1]
        %325 = vset.pattern.permute.xlu0 0
        %326 = vperm.xlu0 %325, %v321
        %v327 = vpop.permute.xlu0 %326
        %v330 = vlaneseq
        %v331 = vshrl.u32 %v330, 7
        %v332 = vsub.s32 0, %v331
        %v333 = vrot.slane %v323, %v332
        %v335 = vmul.f32 %v327, %v333
        %v336 = vadd.f32 %v319, %v335
        %s337 = scalar_lea.vmem %s300, 16
        %v338 = vld [vmem:[%s337] sm:$0xff]
        %s339 = scalar_lea.vmem %s268, 2 [#allocation2]
        %v340 = vld [vmem:[%s339] sm:$0x1]
        %342 = vset.pattern.permute.xlu0 0
        %343 = vperm.xlu0 %342, %v338
        %v344 = vpop.permute.xlu0 %343
        %v347 = vlaneseq
        %v348 = vshrl.u32 %v347, 7
        %v349 = vsub.s32 0, %v348
        %v350 = vrot.slane %v340, %v349
        %v352 = vmul.f32 %v344, %v350
        %v353 = vadd.f32 %v336, %v352
        %s354 = scalar_lea.vmem %s300, 24
        %v355 = vld [vmem:[%s354] sm:$0xff]
        %s356 = scalar_lea.vmem %s268, 3 [#allocation2]
        %v357 = vld [vmem:[%s356] sm:$0x1]
        %359 = vset.pattern.permute.xlu0 0
        %360 = vperm.xlu0 %359, %v355
        %v361 = vpop.permute.xlu0 %360
        %v364 = vlaneseq
        %v365 = vshrl.u32 %v364, 7
        %v366 = vsub.s32 0, %v365
        %v367 = vrot.slane %v357, %v366
        %v369 = vmul.f32 %v361, %v367
        %v370 = vadd.f32 %v353, %v369
        %s371 = scalar_lea.vmem %s300, 32
        %v372 = vld [vmem:[%s371] sm:$0xff]
        %s373 = scalar_lea.vmem %s268, 4 [#allocation2]
        %v374 = vld [vmem:[%s373] sm:$0x1]
        %376 = vset.pattern.permute.xlu0 0
        %377 = vperm.xlu0 %376, %v372
        %v378 = vpop.permute.xlu0 %377
        %v381 = vlaneseq
        %v382 = vshrl.u32 %v381, 7
        %v383 = vsub.s32 0, %v382
        %v384 = vrot.slane %v374, %v383
        %v386 = vmul.f32 %v378, %v384
        %v387 = vadd.f32 %v370, %v386
        %s388 = scalar_lea.vmem %s300, 40
        %v389 = vld [vmem:[%s388] sm:$0xff]
        %s390 = scalar_lea.vmem %s268, 5 [#allocation2]
        %v391 = vld [vmem:[%s390] sm:$0x1]
        %393 = vset.pattern.permute.xlu0 0
        %394 = vperm.xlu0 %393, %v389
        %v395 = vpop.permute.xlu0 %394
        %v398 = vlaneseq
        %v399 = vshrl.u32 %v398, 7
        %v400 = vsub.s32 0, %v399
        %v401 = vrot.slane %v391, %v400
        %v403 = vmul.f32 %v395, %v401
        %v404 = vadd.f32 %v387, %v403
        %s405 = scalar_lea.vmem %s300, 48
        %v406 = vld [vmem:[%s405] sm:$0xff]
        %s407 = scalar_lea.vmem %s268, 6 [#allocation2]
        %v408 = vld [vmem:[%s407] sm:$0x1]
        %410 = vset.pattern.permute.xlu0 0
        %411 = vperm.xlu0 %410, %v406
        %v412 = vpop.permute.xlu0 %411
        %v415 = vlaneseq
        %v416 = vshrl.u32 %v415, 7
        %v417 = vsub.s32 0, %v416
        %v418 = vrot.slane %v408, %v417
        %v420 = vmul.f32 %v412, %v418
        %v421 = vadd.f32 %v404, %v420
        %s422 = scalar_lea.vmem %s300, 56
        %v423 = vld [vmem:[%s422] sm:$0xff]
        %s424 = scalar_lea.vmem %s268, 7 [#allocation2]
        %v425 = vld [vmem:[%s424] sm:$0x1]
        %427 = vset.pattern.permute.xlu0 0
        %428 = vperm.xlu0 %427, %v423
        %v429 = vpop.permute.xlu0 %428
        %v432 = vlaneseq
        %v433 = vshrl.u32 %v432, 7
        %v434 = vsub.s32 0, %v433
        %v435 = vrot.slane %v425, %v434
        %v437 = vmul.f32 %v429, %v435
        %v438 = vadd.f32 %v421, %v437
        %s439 = scalar_lea.vmem %s300, 64
        %v440 = vld [vmem:[%s439] sm:$0xff]
        %s441 = scalar_lea.vmem %s268, 8 [#allocation2]
        %v442 = vld [vmem:[%s441] sm:$0x1]
        %444 = vset.pattern.permute.xlu0 0
        %445 = vperm.xlu0 %444, %v440
        %v446 = vpop.permute.xlu0 %445
        %v449 = vlaneseq
        %v450 = vshrl.u32 %v449, 7
        %v451 = vsub.s32 0, %v450
        %v452 = vrot.slane %v442, %v451
        %v454 = vmul.f32 %v446, %v452
        %v455 = vadd.f32 %v438, %v454
        %s456 = scalar_lea.vmem %s300, 72
        %v457 = vld [vmem:[%s456] sm:$0xff]
        %s458 = scalar_lea.vmem %s268, 9 [#allocation2]
        %v459 = vld [vmem:[%s458] sm:$0x1]
        %461 = vset.pattern.permute.xlu0 0
        %462 = vperm.xlu0 %461, %v457
        %v463 = vpop.permute.xlu0 %462
        %v466 = vlaneseq
        %v467 = vshrl.u32 %v466, 7
        %v468 = vsub.s32 0, %v467
        %v469 = vrot.slane %v459, %v468
        %v471 = vmul.f32 %v463, %v469
        %v472 = vadd.f32 %v455, %v471
        %v473 = vld [vmem:[%s304] sm:$0xff]
        %475 = vset.pattern.permute.xlu0 0
        %476 = vperm.xlu0 %475, %v473
        %v477 = vpop.permute.xlu0 %476
        %v479 = vadd.f32 %v472, %v477
        %vm480 = vcmask 777216
        %481 = vst.msk [vmem:[%s296] sm:$0xff] %vm480, %v479
        %s482 = sand.u32 %s128, 1
        %s483 = scalar_lea.sflag [#allocation4], %s482
        %s484 = sand.u32 %s128, 1
        %s485 = smul.addr %s484, 8
        %s486 = scalar_lea.vmem [#allocation3], %s485
        // Predicated region
        $region74: #{tpu_custom_call.1} parent=68 // pred_check
          %p487 = pneg %p138
        $region75: #{tpu_custom_call.1} parent=68 // pred_check_branch
          %489 = sbr.rel (%p487) target = $region77
        $region76: #{tpu_custom_call.1} parent=68 // pred_region
          %s491 = ssub.s32 128, 128
          %492 = vsyncadd %s483, %s491
          %s493 = sadd.s32 %s24, %s23
          %s494 = sadd.s32 %s493, %s22
          %s495 = smul.addr %s494, 128
          %s496 = scalar_lea.hbm %s3, %s495
          %s498 = sshll.u32 %s486, 4
          %s499 = int_to_ptr.vmem [resolvable:$true] %s498
          %501 = dma.vmem_to_hbm [thread:$0]  %s499, 128, %s496, %s483
        $region77: #{tpu_custom_call.1} parent=68 // pred_fallthru
          _
      $region69: #{tpu_custom_call.1} parent=5 // pred_fallthru
        _
      %p502 = scmp.le.s32.totalorder 2, %s12
      // Predicated region
      $region78: #{tpu_custom_call.1} parent=5 // pred_check
        %p503 = pneg %p502
      $region79: #{tpu_custom_call.1} parent=5 // pred_check_branch
        %505 = sbr.rel (%p503) target = $region81
      $region80: #{tpu_custom_call.1} parent=5 // pred_region
        %s506 = ssub.s32 %s12, 2
        // Predicated region
        $region82: #{tpu_custom_call.1} parent=80 // pred_check
          %p507 = pneg %p144
        $region83: #{tpu_custom_call.1} parent=80 // pred_check_branch
          %509 = sbr.rel (%p507) target = $region85
        $region84: #{tpu_custom_call.1} parent=80 // pred_region
          %s510 = sand.u32 %s129, 1
          %s511 = scalar_lea.sflag [#allocation4], %s510
          %s512 = sand.u32 %s129, 1
          %s513 = smul.addr %s512, 8
          %s514 = scalar_lea.vmem [#allocation3], %s513
          %515 = dma.done %s511, 128
        $region85: #{tpu_custom_call.1} parent=80 // pred_fallthru
          _
      $region81: #{tpu_custom_call.1} parent=5 // pred_fallthru
        _
    $region6: #{tpu_custom_call.1} parent=1 // loop_footer
      %s16 = sadd.s32 1, %s12
    $region7: #{tpu_custom_call.1} parent=1 // loop_footer_branch
      %11 = sbr.rel target = $region3
    $region8: #{tpu_custom_call.1} parent=1 // loop_exit
      _
    %516 = vsyncpa [#allocation4], 1
    %s517 = scalar_lea.sflag [#allocation4], 1
    %518 = vsyncpa %s517, 1

</llo_original>
